<compile_context>
chip_gen: v6e
topology: v6e:2x2x1
jax: 0.10.0
libtpu: 0.0.40
codegen_flags: <defaults>
</compile_context>

<pallas_src>
import functools

import jax
import jax.numpy as jnp
from jax.experimental import pallas as pl
from jax.experimental.pallas import tpu as pltpu

SUBLANE = 8  # f32 sublane granularity: row-tile sizes must be multiples of 8


def _gate_kernel(x_ref, w_ref, b_ref, o_ref):
    # x_ref: (TB, D), w_ref: (D, E), b_ref: (1, E), o_ref: (TB, E)
    acc = jnp.dot(x_ref[...], w_ref[...], preferred_element_type=jnp.float32)
    o_ref[...] = jnp.tanh(acc + b_ref[...]).astype(o_ref.dtype)


def _round_up(n, m):
    return ((n + m - 1) // m) * m


def prepare_gate_params(weight, bias):
    """One-time parameter prep (outside the per-call path).

    weight: [E, D] (PyTorch nn.Linear layout), bias: [E].
    Returns (w_t [D, E], b2 [1, E]) — pre-transposed, no padding needed.
    """
    E, _ = weight.shape
    return weight.T, bias.reshape(1, E)


@functools.partial(jax.jit, static_argnames=("block_b",))
def gate_func(x, w_t, b2, *, block_b=4096):
    """gate = tanh(x @ W^T + b), with W pre-transposed to [D, E]."""
    B, D = x.shape
    E = w_t.shape[1]

    # Row tile: big enough to amortize per-step overhead, clamped for tiny B.
    tb = min(block_b, _round_up(B, SUBLANE))
    grid = (pl.cdiv(B, tb),)  # partial final block handled by Pallas

    return pl.pallas_call(
        _gate_kernel,
        out_shape=jax.ShapeDtypeStruct((B, E), x.dtype),
        grid=grid,
        in_specs=[
            pl.BlockSpec((tb, D), lambda i: (i, 0)),   # stream x over batch
            pl.BlockSpec((D, E), lambda i: (0, 0)),    # weight resident
            pl.BlockSpec((1, E), lambda i: (0, 0)),    # bias resident
        ],
        out_specs=pl.BlockSpec((tb, E), lambda i: (i, 0)),  # exact (B, E) out
        compiler_params=pltpu.CompilerParams(
            # Batch tiles are independent -> shard across v7x's 2 TensorCores.
            dimension_semantics=("parallel",),
        ),
    )(x, w_t, b2)


if __name__ == "__main__":
    # Small shapes consistent with the module: Linear(in_dim=32, n_expert=8).
    B, in_dim, n_expert = 8, 32, 8
    key = jax.random.PRNGKey(0)
    kx, kw, kb = jax.random.split(key, 3)

    x = jax.random.normal(kx, (B, in_dim), dtype=jnp.float32)
    # nn.Linear(in_dim, n_expert): weight [n_expert, in_dim], bias [n_expert]
    weight = jax.random.normal(kw, (n_expert, in_dim), dtype=jnp.float32) * 0.1
    bias = jax.random.normal(kb, (n_expert,), dtype=jnp.float32) * 0.1

    # One-time parameter preparation (mirrors storing W pre-transposed).
    w_t, b2 = prepare_gate_params(weight, bias)

    out = gate_func(x, w_t, b2)
    jax.block_until_ready(out)

    ref = jnp.tanh(x @ weight.T + bias)
    assert out.shape == (B, n_expert)
    assert out.dtype == x.dtype
    assert jnp.allclose(out, ref, atol=1e-5, rtol=1e-5)

    # Streaming path: B not a multiple of the tile, multiple grid steps, and a
    # partial final block — no wrapper pad or slice anywhere.
    B_big = 1027
    x_big = jax.random.normal(jax.random.PRNGKey(1), (B_big, in_dim),
                              dtype=jnp.float32)
    out_big = gate_func(x_big, w_t, b2, block_b=512)
    jax.block_until_ready(out_big)
    ref_big = jnp.tanh(x_big @ weight.T + bias)
    assert out_big.shape == (B_big, n_expert)
    assert jnp.allclose(out_big, ref_big, atol=1e-5, rtol=1e-5)

    # Default (large-tile) path on the bigger batch as well.
    out_big2 = gate_func(x_big, w_t, b2)
    jax.block_until_ready(out_big2)
    assert jnp.allclose(out_big2, ref_big, atol=1e-5, rtol=1e-5)

    print("KERNEL_OK")
</pallas_src>

<mosaic_0001>
module attributes {stable_mosaic.version = 11 : i64} {
  func.func @_gate_kernel(%arg0: i32, %arg1: memref<8x32xf32, #tpu.memory_space<vmem>>, %arg2: memref<32x8xf32, #tpu.memory_space<vmem>>, %arg3: memref<1x8xf32, #tpu.memory_space<vmem>>, %arg4: memref<8x8xf32, #tpu.memory_space<vmem>>) attributes {dimension_semantics = [#tpu.dimension_semantics<parallel>], iteration_bounds = array<i64: 1>, scalar_prefetch = 0 : i64, scratch_operands = 0 : i64, tpu.core_type = #tpu.core_type<tc>, window_params = [{transform_indices = @transform_0, window_bounds = array<i64: 8, 32>}, {pipeline_mode = #tpu.pipeline_mode<synchronous>, transform_indices = @transform_1, window_bounds = array<i64: 32, 8>}, {pipeline_mode = #tpu.pipeline_mode<synchronous>, transform_indices = @transform_2, window_bounds = array<i64: 1, 8>}, {transform_indices = @transform_3, window_bounds = array<i64: 8, 8>}]} {
    %c0 = arith.constant 0 : index
    %c0_0 = arith.constant 0 : index
    %0 = vector.load %arg1[%c0, %c0_0] : memref<8x32xf32, #tpu.memory_space<vmem>>, vector<8x32xf32>
    %c0_1 = arith.constant 0 : index
    %c0_2 = arith.constant 0 : index
    %1 = vector.load %arg2[%c0_1, %c0_2] : memref<32x8xf32, #tpu.memory_space<vmem>>, vector<32x8xf32>
    %cst = arith.constant dense<0.000000e+00> : vector<8x8xf32>
    %2 = tpu.matmul %0, %1, %cst {dimension_numbers = #tpu.dot_dimension_numbers<[1], [0], [0], [1], [0, 0, 1, 1], [], []>} : vector<8x32xf32>, vector<32x8xf32>, vector<8x8xf32> -> vector<8x8xf32>
    %c0_3 = arith.constant 0 : index
    %c0_4 = arith.constant 0 : index
    %3 = vector.load %arg3[%c0_3, %c0_4] : memref<1x8xf32, #tpu.memory_space<vmem>>, vector<1x8xf32>
    %4 = vector.broadcast %3 : vector<1x8xf32> to vector<8x8xf32>
    %5 = arith.addf %2, %4 : vector<8x8xf32>
    %6 = math.tanh %5 : vector<8x8xf32>
    %c0_5 = arith.constant 0 : index
    %c0_6 = arith.constant 0 : index
    %7 = vector.load %arg4[%c0_5, %c0_6] : memref<8x8xf32, #tpu.memory_space<vmem>>, vector<8x8xf32>
    tpu.vector_store %arg4[%c0_5, %c0_6], %6 {strides = array<i32>} : memref<8x8xf32, #tpu.memory_space<vmem>>, vector<8x8xf32>,
    return
  }
  func.func @transform_0(%arg0: i32) -> (i32, i32) {
    %c0_i32 = arith.constant 0 : i32
    %c0_i32_0 = arith.constant 0 : i32
    return %arg0, %c0_i32 : i32, i32
  }
  func.func @transform_1(%arg0: i32) -> (i32, i32) {
    %c0_i32 = arith.constant 0 : i32
    %c0_i32_0 = arith.constant 0 : i32
    %c0_i32_1 = arith.constant 0 : i32
    return %c0_i32, %c0_i32_0 : i32, i32
  }
  func.func @transform_2(%arg0: i32) -> (i32, i32) {
    %c0_i32 = arith.constant 0 : i32
    %c0_i32_0 = arith.constant 0 : i32
    %c0_i32_1 = arith.constant 0 : i32
    return %c0_i32, %c0_i32_0 : i32, i32
  }
  func.func @transform_3(%arg0: i32) -> (i32, i32) {
    %c0_i32 = arith.constant 0 : i32
    %c0_i32_0 = arith.constant 0 : i32
    return %arg0, %c0_i32 : i32, i32
  }
}

</mosaic_0001>

<llo_original>
// kernel: gate_func.1
$region0: #{gate_func.1}
  #allocation0 [shape = 'u32[]', space=smem, size = 0x4, offset = 0x4, fixed_abs, tag = 'smem constant byte address 0x4 - core index']
  #allocation1 [shape = 'u32[144,128]{1,0:T(1,128)}', space=vmem, size = 0x12000, scoped, tag = 'internal scratch']
  %s0 = inlined_call_operand.vmem [shape: f32[8,32], index: 0, kind: input, shape index: {}]
  %s1 = inlined_call_operand.vmem [shape: f32[32,8], index: 1, kind: input, shape index: {}]
  %s2 = inlined_call_operand.vmem [shape: f32[1,8], index: 2, kind: input, shape index: {}]
  %s3 = inlined_call_operand.hbm [shape: f32[8,8], index: 3, kind: output, shape index: {}]
  %s4 = sld [smem:[#allocation0]]
  $region22: #{gate_func.1} parent=0
    _
  %s6 = ssub.s32 1, %s4
  %s7 = scalar_select 0, %s6, %s4
  $region1: #{gate_func.1} parent=0
    #allocation2 [shape = 'u8[4096]{0}', space=vmem, size = 0x1000, scoped, tag = 'output window, operand 0, single buffered']
    #allocation3 [shape = 's32[1]{0}', space=sflag, size = 0x4, scoped, tag = 'scoped memory for gate_func.1']
    %8 = vsyncpa [#allocation3], 0
    // Predicated region
    $region2: #{gate_func.1} parent=1 // pred_check
      _
    $region3: #{gate_func.1} parent=1 // pred_check_branch
      %10 = sbr.rel (0) target = $region5
    $region4: #{gate_func.1} parent=1 // pred_region
      _
    $region5: #{gate_func.1} parent=1 // pred_fallthru
      _
    // Predicated region
    $region6: #{gate_func.1} parent=1 // pred_check
      _
    $region7: #{gate_func.1} parent=1 // pred_check_branch
      %12 = sbr.rel (0) target = $region9
    $region8: #{gate_func.1} parent=1 // pred_region
      _
    $region9: #{gate_func.1} parent=1 // pred_fallthru
      _
    // Predicated region
    $region10: #{gate_func.1} parent=1 // pred_check
      _
    $region11: #{gate_func.1} parent=1 // pred_check_branch
      %14 = sbr.rel (0) target = $region13
    $region12: #{gate_func.1} parent=1 // pred_region
      _
    $region13: #{gate_func.1} parent=1 // pred_fallthru
      _
    %v15 = vld [vmem:[%s0] sm:$0xff]
    %v16 = vld [vmem:[%s1] sm:$0xff]
    %v17 = vld [vmem:[%s1 + $0x8] sm:$0xff]
    %v18 = vld [vmem:[%s1 + $0x10] sm:$0xff]
    %v19 = vld [vmem:[%s1 + $0x18] sm:$0xff]
    %v20 = vld [vmem:[%s2] sm:$0x1]
    %v22 = vlaneseq
    %v23 = vshrl.u32 %v22, 7
    %v24 = vsub.s32 0, %v23
    %v25 = vrot.slane %v20, %v24
    %vm27 = vcmask 261120
    %v29 = vsel %vm27, %v15, 0
    %31 = vmatprep.subr.mxu0 0.0
    %32 = vmatpush1.msra.mxu0 0.0
    %33 = vmatprep.subr.mxu0 0.0
    %34 = vmatpush1.msra.mxu0 0.0
    %35 = vmatprep.subr.mxu0 0.0
    %36 = vmatpush1.msra.mxu0 0.0
    %37 = vmatprep.subr.mxu0 0.0
    %38 = vmatpush1.msra.mxu0 0.0
    %39 = vmatprep.subr.mxu0 0.0
    %40 = vmatpush1.msra.mxu0 0.0
    %41 = vmatprep.subr.mxu0 0.0
    %42 = vmatpush1.msra.mxu0 0.0
    %43 = vmatprep.subr.mxu0 0.0
    %44 = vmatpush1.msra.mxu0 0.0
    %45 = vmatprep.subr.mxu0 0.0
    %46 = vmatpush1.msra.mxu0 0.0
    %47 = vmatprep.subr.mxu0 0.0
    %48 = vmatpush1.msra.mxu0 0.0
    %49 = vmatprep.subr.mxu0 0.0
    %50 = vmatpush1.msra.mxu0 0.0
    %51 = vmatprep.subr.mxu0 0.0
    %52 = vmatpush1.msra.mxu0 0.0
    %53 = vmatprep.subr.mxu0 0.0
    %54 = vmatpush1.msra.mxu0 0.0
    %55 = vmatprep.subr.mxu0 0.0
    %56 = vmatpush1.msra.mxu0 %v19
    %57 = vmatprep.subr.mxu0 0.0
    %58 = vmatpush1.msra.mxu0 %v18
    %59 = vmatprep.subr.mxu0 0.0
    %60 = vmatpush1.msra.mxu0 %v17
    %61 = vmatprep.subr.mxu0 0.0
    %62 = vmatpush1.msra.mxu0 %v16
    %63 = vmatprep.subr.mxu0 0.0
    %64 = vmatpush2.msra.mxu0 0.0
    %65 = vmatprep.subr.mxu0 0.0
    %66 = vmatpush2.msra.mxu0 0.0
    %67 = vmatprep.subr.mxu0 0.0
    %68 = vmatpush2.msra.mxu0 0.0
    %69 = vmatprep.subr.mxu0 0.0
    %70 = vmatpush2.msra.mxu0 0.0
    %71 = vmatprep.subr.mxu0 0.0
    %72 = vmatpush2.msra.mxu0 0.0
    %73 = vmatprep.subr.mxu0 0.0
    %74 = vmatpush2.msra.mxu0 0.0
    %75 = vmatprep.subr.mxu0 0.0
    %76 = vmatpush2.msra.mxu0 0.0
    %77 = vmatprep.subr.mxu0 0.0
    %78 = vmatpush2.msra.mxu0 0.0
    %79 = vmatprep.subr.mxu0 0.0
    %80 = vmatpush2.msra.mxu0 0.0
    %81 = vmatprep.subr.mxu0 0.0
    %82 = vmatpush2.msra.mxu0 0.0
    %83 = vmatprep.subr.mxu0 0.0
    %84 = vmatpush2.msra.mxu0 0.0
    %85 = vmatprep.subr.mxu0 0.0
    %86 = vmatpush2.msra.mxu0 0.0
    %87 = vmatprep.subr.mxu0 0.0
    %88 = vmatpush2.msra.mxu0 0.0
    %89 = vmatprep.subr.mxu0 0.0
    %90 = vmatpush2.msra.mxu0 0.0
    %91 = vmatprep.subr.mxu0 0.0
    %92 = vmatpush2.msra.mxu0 0.0
    %93 = vmatprep.subr.mxu0 0.0
    %94 = vmatpush2.msra.mxu0 0.0
    %95 = vmatprep.mubr.f32.mxu0 0.0
    %96 = vmatmul.mubr.f32.gmra.mxu0 %v29
    %v97 = vpop.f32.mrf.mxu0
    %v98 = vadd.f32 %v25, %v97
    %v99 = vpop.f32.mrf.mxu0
    %100 = vdwg.mxu0
    %v101 = vtanh.pop %v98
    %vm102 = vcmask 64512
    %103 = vst.msk [vmem:[#allocation2] sm:$0xff] %vm102, %v101
    // Predicated region
    $region14: #{gate_func.1} parent=1 // pred_check
      _
    $region15: #{gate_func.1} parent=1 // pred_check_branch
      %105 = sbr.rel (0) target = $region17
    $region16: #{gate_func.1} parent=1 // pred_region
      %s107 = ssub.s32 128, 128
      %108 = vsyncadd [#allocation3], %s107
      %s110 = sshll.u32 [#allocation2], 4
      %s111 = int_to_ptr.vmem [resolvable:$true] %s110
      %113 = dma.vmem_to_hbm [thread:$0]  %s111, 128, %s3, [#allocation3]
    $region17: #{gate_func.1} parent=1 // pred_fallthru
      _
    // Predicated region
    $region18: #{gate_func.1} parent=1 // pred_check
      _
    $region19: #{gate_func.1} parent=1 // pred_check_branch
      %115 = sbr.rel (0) target = $region21
    $region20: #{gate_func.1} parent=1 // pred_region
      %116 = dma.done [#allocation3], 128
    $region21: #{gate_func.1} parent=1 // pred_fallthru
      _
    %117 = vsyncpa [#allocation3], 1

</llo_original>
